<compile_context>
chip_gen: v6e
topology: v6e:2x2x1
jax: 0.10.0
libtpu: 0.0.40
codegen_flags: <defaults>
</compile_context>

<pallas_src>
import jax
import jax.numpy as jnp
import numpy as np
from jax.experimental import pallas as pl
from jax.experimental.pallas import tpu as pltpu


def _l_spa_kernel(org_ref, enh_ref, ph_ref, pwt_ref, out_ref):
    # org_ref / enh_ref: (TB, C, H, W) block; ph_ref: (Hp, H) row-pool matrix
    # with entries 0.25/C (channel-mean folded in); pwt_ref: (W, Wp) col-pool
    # matrix (entries 0.25), transposed; out_ref: (TB, 1, Hp, Wp) block.
    tb = org_ref.shape[0]
    hp, wp = out_ref.shape[2], out_ref.shape[3]

    ph = ph_ref[...]     # (Hp, H)
    pwt = pwt_ref[...]   # (W, Wp)

    # Single vectorized pass over the whole batch tile: channel-SUMMED
    # difference (the 1/C normalization lives inside `ph`).
    diff = org_ref[...].astype(jnp.float32) - enh_ref[...].astype(jnp.float32)
    dsum = jnp.sum(diff, axis=1)                                     # (TB, H, W)

    # Boundary masks for the zero-padded shift-differences (hoisted out of the
    # unrolled loop; JAX does not CSE broadcasts).
    row = jax.lax.broadcasted_iota(jnp.int32, (hp, wp), 0)
    col = jax.lax.broadcasted_iota(jnp.int32, (hp, wp), 1)

    for t in range(tb):  # TB is small and static -> fully unrolled
        # D = avgpool4(mean_c(org - enh));  AvgPool2d(4) == Ph @ X @ Pw^T.
        d = jnp.dot(jnp.dot(ph, dsum[t], preferred_element_type=jnp.float32),
                    pwt, preferred_element_type=jnp.float32)         # (Hp, Wp)

        # Zero-padded shifted copies of D (the four fixed 3x3 convs) via XLU
        # rolls; wrap-around entries are exactly the masked boundary positions.
        sl = jnp.where(col == 0,      0.0, pltpu.roll(d, 1,      axis=1))  # d[i, j-1]
        sr = jnp.where(col == wp - 1, 0.0, pltpu.roll(d, wp - 1, axis=1))  # d[i, j+1]
        su = jnp.where(row == 0,      0.0, pltpu.roll(d, 1,      axis=0))  # d[i-1, j]
        sd = jnp.where(row == hp - 1, 0.0, pltpu.roll(d, hp - 1, axis=0))  # d[i+1, j]

        out_ref[t, 0] = ((d - sl) ** 2 + (d - sr) ** 2 +
                         (d - su) ** 2 + (d - sd) ** 2)


def _pool_matrix(out_dim, in_dim, factor=4, scale=1.0):
    m = np.zeros((out_dim, in_dim), dtype=np.float32)
    for i in range(out_dim):
        m[i, i * factor:(i + 1) * factor] = scale / factor
    return jnp.asarray(m)


def _choose_tb(b, c, h, w, itemsize, max_block_bytes=8 << 20):
    """Largest batch tile whose input block stays small enough, preferring >=2
    grid steps so v7x megacore can shard the 'parallel' axis across its 2 TCs."""
    per_elem = c * h * w * itemsize
    divisors = [d for d in range(1, b + 1)
                if b % d == 0 and d * per_elem <= max_block_bytes]
    if not divisors:
        return 1
    preferred = [d for d in divisors if b // d >= 2]
    return max(preferred) if preferred else max(divisors)


def l_spa(org, enhance):
    """Pallas implementation of L_spa.forward.  org, enhance: (B, C, H, W)."""
    b, c, h, w = org.shape
    assert h % 4 == 0 and w % 4 == 0
    hp, wp = h // 4, w // 4

    tb = _choose_tb(b, c, h, w, jnp.dtype(org.dtype).itemsize)

    ph = _pool_matrix(hp, h, scale=1.0 / c)   # (Hp, H): row pooling * channel mean
    pwt = _pool_matrix(wp, w).T               # (W, Wp): col pooling

    return pl.pallas_call(
        _l_spa_kernel,
        out_shape=jax.ShapeDtypeStruct((b, 1, hp, wp), jnp.float32),
        grid=(b // tb,),
        in_specs=[
            pl.BlockSpec((tb, c, h, w), lambda i: (i, 0, 0, 0)),   # org
            pl.BlockSpec((tb, c, h, w), lambda i: (i, 0, 0, 0)),   # enhance
            pl.BlockSpec((hp, h), lambda i: (0, 0)),               # ph (resident)
            pl.BlockSpec((w, wp), lambda i: (0, 0)),               # pwt (resident)
        ],
        out_specs=pl.BlockSpec((tb, 1, hp, wp), lambda i: (i, 0, 0, 0)),
        compiler_params=pltpu.CompilerParams(
            dimension_semantics=("parallel",),
            vmem_limit_bytes=48 * 1024 * 1024,
        ),
    )(org, enhance, ph, pwt)


def _ref_l_spa(org, enhance):
    """Pure-JAX reference matching the PyTorch forward."""
    om = jnp.mean(org, axis=1, keepdims=True)
    em = jnp.mean(enhance, axis=1, keepdims=True)
    b, _, h, w = om.shape
    op = om.reshape(b, 1, h // 4, 4, w // 4, 4).mean(axis=(3, 5))
    ep = em.reshape(b, 1, h // 4, 4, w // 4, 4).mean(axis=(3, 5))

    def shifts(x):
        xp = jnp.pad(x, ((0, 0), (0, 0), (1, 1), (1, 1)))
        left = x - xp[:, :, 1:-1, 0:-2]
        right = x - xp[:, :, 1:-1, 2:]
        up = x - xp[:, :, 0:-2, 1:-1]
        down = x - xp[:, :, 2:, 1:-1]
        return left, right, up, down

    ol, orr, ou, od = shifts(op)
    el, er, eu, ed = shifts(ep)
    return (ol - el) ** 2 + (orr - er) ** 2 + (ou - eu) ** 2 + (od - ed) ** 2


if __name__ == "__main__":
    key = jax.random.PRNGKey(0)
    k1, k2 = jax.random.split(key)
    b, c, h, w = 2, 4, 32, 32
    org = jax.random.uniform(k1, (b, c, h, w), dtype=jnp.float32)
    enhance = jax.random.uniform(k2, (b, c, h, w), dtype=jnp.float32)

    out = l_spa(org, enhance)
    out = jax.block_until_ready(out)

    ref = _ref_l_spa(org, enhance)
    np.testing.assert_allclose(np.asarray(out), np.asarray(ref), atol=1e-5, rtol=1e-5)

    print("KERNEL_OK")
</pallas_src>

<mosaic_0001>
module attributes {stable_mosaic.version = 11 : i64} {
  func.func @_l_spa_kernel(%arg0: i32, %arg1: memref<1x4x32x32xf32, #tpu.memory_space<vmem>>, %arg2: memref<1x4x32x32xf32, #tpu.memory_space<vmem>>, %arg3: memref<8x32xf32, #tpu.memory_space<vmem>>, %arg4: memref<32x8xf32, #tpu.memory_space<vmem>>, %arg5: memref<1x1x8x8xf32, #tpu.memory_space<vmem>>) attributes {dimension_semantics = [#tpu.dimension_semantics<parallel>], iteration_bounds = array<i64: 2>, scalar_prefetch = 0 : i64, scratch_operands = 0 : i64, tpu.core_type = #tpu.core_type<tc>, window_params = [{transform_indices = @transform_0, window_bounds = array<i64: 1, 4, 32, 32>}, {transform_indices = @transform_1, window_bounds = array<i64: 1, 4, 32, 32>}, {pipeline_mode = #tpu.pipeline_mode<synchronous>, transform_indices = @transform_2, window_bounds = array<i64: 8, 32>}, {pipeline_mode = #tpu.pipeline_mode<synchronous>, transform_indices = @transform_3, window_bounds = array<i64: 32, 8>}, {transform_indices = @transform_4, window_bounds = array<i64: 1, 1, 8, 8>}]} {
    %c0 = arith.constant 0 : index
    %c0_0 = arith.constant 0 : index
    %0 = vector.load %arg3[%c0, %c0_0] : memref<8x32xf32, #tpu.memory_space<vmem>>, vector<8x32xf32>
    %c0_1 = arith.constant 0 : index
    %c0_2 = arith.constant 0 : index
    %1 = vector.load %arg4[%c0_1, %c0_2] : memref<32x8xf32, #tpu.memory_space<vmem>>, vector<32x8xf32>
    %c0_3 = arith.constant 0 : index
    %c0_4 = arith.constant 0 : index
    %c0_5 = arith.constant 0 : index
    %c0_6 = arith.constant 0 : index
    %2 = vector.load %arg1[%c0_3, %c0_4, %c0_5, %c0_6] : memref<1x4x32x32xf32, #tpu.memory_space<vmem>>, vector<1x4x32x32xf32>
    %c0_7 = arith.constant 0 : index
    %c0_8 = arith.constant 0 : index
    %c0_9 = arith.constant 0 : index
    %c0_10 = arith.constant 0 : index
    %3 = vector.load %arg2[%c0_7, %c0_8, %c0_9, %c0_10] : memref<1x4x32x32xf32, #tpu.memory_space<vmem>>, vector<1x4x32x32xf32>
    %4 = arith.subf %2, %3 : vector<1x4x32x32xf32>
    %cst = arith.constant dense<0.000000e+00> : vector<1x32x32xf32>
    %5 = vector.multi_reduction <add>, %4, %cst [1] : vector<1x4x32x32xf32> to vector<1x32x32xf32>
    %6 = tpu.iota {dimensions = array<i32: 0>} : vector<8x8xi32>
    %7 = tpu.iota {dimensions = array<i32: 1>} : vector<8x8xi32>
    %8 = vector.shape_cast %5 : vector<1x32x32xf32> to vector<32x32xf32>
    %cst_11 = arith.constant dense<0.000000e+00> : vector<8x32xf32>
    %9 = tpu.matmul %0, %8, %cst_11 {dimension_numbers = #tpu.dot_dimension_numbers<[1], [0], [0], [1], [0, 0, 1, 1], [], []>} : vector<8x32xf32>, vector<32x32xf32>, vector<8x32xf32> -> vector<8x32xf32>
    %cst_12 = arith.constant dense<0.000000e+00> : vector<8x8xf32>
    %10 = tpu.matmul %9, %1, %cst_12 {dimension_numbers = #tpu.dot_dimension_numbers<[1], [0], [0], [1], [0, 0, 1, 1], [], []>} : vector<8x32xf32>, vector<32x8xf32>, vector<8x8xf32> -> vector<8x8xf32>
    %c0_i32 = arith.constant 0 : i32
    %11 = vector.broadcast %c0_i32 : i32 to vector<8x8xi32>
    %12 = arith.cmpi eq, %7, %11 : vector<8x8xi32>
    %c1_i32 = arith.constant 1 : i32
    %13 = tpu.dynamic_rotate %10 by %c1_i32 dim 1 : vector<8x8xf32>, i32 -> vector<8x8xf32>
    %cst_13 = arith.constant 0.000000e+00 : f32
    %14 = vector.broadcast %cst_13 : f32 to vector<8x8xf32>
    %15 = arith.select %12, %14, %13 : vector<8x8xi1>, vector<8x8xf32>
    %c7_i32 = arith.constant 7 : i32
    %16 = vector.broadcast %c7_i32 : i32 to vector<8x8xi32>
    %17 = arith.cmpi eq, %7, %16 : vector<8x8xi32>
    %c7_i32_14 = arith.constant 7 : i32
    %18 = tpu.dynamic_rotate %10 by %c7_i32_14 dim 1 : vector<8x8xf32>, i32 -> vector<8x8xf32>
    %cst_15 = arith.constant 0.000000e+00 : f32
    %19 = vector.broadcast %cst_15 : f32 to vector<8x8xf32>
    %20 = arith.select %17, %19, %18 : vector<8x8xi1>, vector<8x8xf32>
    %c0_i32_16 = arith.constant 0 : i32
    %21 = vector.broadcast %c0_i32_16 : i32 to vector<8x8xi32>
    %22 = arith.cmpi eq, %6, %21 : vector<8x8xi32>
    %c1_i32_17 = arith.constant 1 : i32
    %23 = tpu.dynamic_rotate %10 by %c1_i32_17 dim 0 : vector<8x8xf32>, i32 -> vector<8x8xf32>
    %cst_18 = arith.constant 0.000000e+00 : f32
    %24 = vector.broadcast %cst_18 : f32 to vector<8x8xf32>
    %25 = arith.select %22, %24, %23 : vector<8x8xi1>, vector<8x8xf32>
    %c7_i32_19 = arith.constant 7 : i32
    %26 = vector.broadcast %c7_i32_19 : i32 to vector<8x8xi32>
    %27 = arith.cmpi eq, %6, %26 : vector<8x8xi32>
    %c7_i32_20 = arith.constant 7 : i32
    %28 = tpu.dynamic_rotate %10 by %c7_i32_20 dim 0 : vector<8x8xf32>, i32 -> vector<8x8xf32>
    %cst_21 = arith.constant 0.000000e+00 : f32
    %29 = vector.broadcast %cst_21 : f32 to vector<8x8xf32>
    %30 = arith.select %27, %29, %28 : vector<8x8xi1>, vector<8x8xf32>
    %31 = arith.subf %10, %15 : vector<8x8xf32>
    %32 = arith.mulf %31, %31 : vector<8x8xf32>
    %33 = arith.subf %10, %20 : vector<8x8xf32>
    %34 = arith.mulf %33, %33 : vector<8x8xf32>
    %35 = arith.addf %32, %34 : vector<8x8xf32>
    %36 = arith.subf %10, %25 : vector<8x8xf32>
    %37 = arith.mulf %36, %36 : vector<8x8xf32>
    %38 = arith.addf %35, %37 : vector<8x8xf32>
    %39 = arith.subf %10, %30 : vector<8x8xf32>
    %40 = arith.mulf %39, %39 : vector<8x8xf32>
    %41 = arith.addf %38, %40 : vector<8x8xf32>
    %c0_22 = arith.constant 0 : index
    %c0_23 = arith.constant 0 : index
    %c0_24 = arith.constant 0 : index
    %c0_25 = arith.constant 0 : index
    %42 = vector.load %arg5[%c0_22, %c0_23, %c0_24, %c0_25] : memref<1x1x8x8xf32, #tpu.memory_space<vmem>>, vector<1x1x8x8xf32>
    %43 = vector.shape_cast %42 : vector<1x1x8x8xf32> to vector<8x8xf32>
    %44 = vector.shape_cast %41 : vector<8x8xf32> to vector<1x1x8x8xf32>
    tpu.vector_store %arg5[%c0_22, %c0_23, %c0_24, %c0_25], %44 {strides = array<i32>} : memref<1x1x8x8xf32, #tpu.memory_space<vmem>>, vector<1x1x8x8xf32>,
    return
  }
  func.func @transform_0(%arg0: i32) -> (i32, i32, i32, i32) {
    %c0_i32 = arith.constant 0 : i32
    %c0_i32_0 = arith.constant 0 : i32
    %c0_i32_1 = arith.constant 0 : i32
    %c0_i32_2 = arith.constant 0 : i32
    return %arg0, %c0_i32, %c0_i32_0, %c0_i32_1 : i32, i32, i32, i32
  }
  func.func @transform_1(%arg0: i32) -> (i32, i32, i32, i32) {
    %c0_i32 = arith.constant 0 : i32
    %c0_i32_0 = arith.constant 0 : i32
    %c0_i32_1 = arith.constant 0 : i32
    %c0_i32_2 = arith.constant 0 : i32
    return %arg0, %c0_i32, %c0_i32_0, %c0_i32_1 : i32, i32, i32, i32
  }
  func.func @transform_2(%arg0: i32) -> (i32, i32) {
    %c0_i32 = arith.constant 0 : i32
    %c0_i32_0 = arith.constant 0 : i32
    %c0_i32_1 = arith.constant 0 : i32
    return %c0_i32, %c0_i32_0 : i32, i32
  }
  func.func @transform_3(%arg0: i32) -> (i32, i32) {
    %c0_i32 = arith.constant 0 : i32
    %c0_i32_0 = arith.constant 0 : i32
    %c0_i32_1 = arith.constant 0 : i32
    return %c0_i32, %c0_i32_0 : i32, i32
  }
  func.func @transform_4(%arg0: i32) -> (i32, i32, i32, i32) {
    %c0_i32 = arith.constant 0 : i32
    %c0_i32_0 = arith.constant 0 : i32
    %c0_i32_1 = arith.constant 0 : i32
    %c0_i32_2 = arith.constant 0 : i32
    return %arg0, %c0_i32, %c0_i32_0, %c0_i32_1 : i32, i32, i32, i32
  }
}

</mosaic_0001>

<llo_original>
// kernel: tpu_custom_call.1
$region0: #{tpu_custom_call.1}
  #allocation0 [shape = 'u32[]', space=smem, size = 0x4, offset = 0x4, fixed_abs, tag = 'smem constant byte address 0x4 - core index']
  #allocation1 [shape = 'u32[144,128]{1,0:T(1,128)}', space=vmem, size = 0x12000, scoped, tag = 'internal scratch']
  %s0 = inlined_call_operand.hbm [shape: f32[2,4,32,32], index: 0, kind: input, shape index: {}]
  %s1 = inlined_call_operand.hbm [shape: f32[2,4,32,32], index: 1, kind: input, shape index: {}]
  %s2 = inlined_call_operand.vmem [shape: f32[8,32], index: 2, kind: input, shape index: {}]
  %s3 = inlined_call_operand.vmem [shape: f32[32,8], index: 3, kind: input, shape index: {}]
  %s4 = inlined_call_operand.hbm [shape: f32[2,1,8,8], index: 4, kind: output, shape index: {}]
  %s5 = sld [smem:[#allocation0]]
  $region57: #{tpu_custom_call.1} parent=0
    _
  %s7 = ssub.s32 1, %s5
  %s8 = scalar_select 0, %s7, %s5
  $region1: #{tpu_custom_call.1} parent=0
    #allocation2 [shape = 'u8[131072]{0}', space=vmem, size = 0x20000, scoped, tag = 'input window, operand 0']
    #allocation3 [shape = 's32[2]{0}', space=sflag, size = 0x8, scoped, tag = 'scoped memory for tpu_custom_call.1']
    #allocation4 [shape = 's32[2]{0}', space=sflag, size = 0x8, scoped, tag = 'scoped memory for tpu_custom_call.1']
    #allocation5 [shape = 'u8[131072]{0}', space=vmem, size = 0x20000, scoped, tag = 'input window, operand 1']
    #allocation6 [shape = 's32[2]{0}', space=sflag, size = 0x8, scoped, tag = 'scoped memory for tpu_custom_call.1']
    #allocation7 [shape = 'u8[8192]{0}', space=vmem, size = 0x2000, scoped, tag = 'output window, operand 0']
    %9 = vsyncpa [#allocation3], 0
    %s10 = scalar_lea.sflag [#allocation3], 1
    %11 = vsyncpa %s10, 0
    %12 = vsyncpa [#allocation6], 0
    %s13 = scalar_lea.sflag [#allocation6], 1
    %14 = vsyncpa %s13, 0
    %15 = vsyncpa [#allocation4], 0
    %s16 = scalar_lea.sflag [#allocation4], 1
    %17 = vsyncpa %s16, 0
    loop: start=0, step=1, limit=4
    $region2: #{tpu_custom_call.1} parent=1 // loop_pre_header
      _
    $region3: #{tpu_custom_call.1} parent=1 // loop_header
      %s19 = sphi 0, %s23
      %p20 = scmp.ge.s32.totalorder %s19, 4
      %s29 = sphi 0, %s31
      %s32 = sphi 0, %s29
      %s33 = sphi 0, %s32
      %s49 = sphi 0, %s33
      %s55 = sphi 0, %s57
      %s58 = sphi 0, %s55
      %s59 = sphi 0, %s58
      %s75 = sphi 0, %s59
      %s79 = sphi 0, %s79
      %s81 = sphi 0, %s79
      %s82 = sphi 0, %s81
      %s96 = sphi 0, %s82
      %s100 = sphi 0, %s100
      %s102 = sphi 0, %s100
      %s103 = sphi 0, %s102
      %s117 = sphi 0, %s103
      %s123 = sphi 0, %s125
      %s126 = sphi 0, %s123
      %s127 = sphi 0, %s126
      %s143 = sphi 0, %s127
    $region4: #{tpu_custom_call.1} parent=1 // loop_header_branch
      %22 = sbr.rel (%p20) target = $region8
    $region5: #{tpu_custom_call.1} parent=1 // loop_body
      %s24 = ssub.s32 %s19, 1
      %s25 = ssub.s32 %s19, 2
      %s26 = sadd.s32 %s19, 1
      %s27 = ssub.s32 %s19, %s26
      %p28 = scmp.eq.s32.totalorder %s27, 0
      %s30 = sadd.s32 %s29, 1
      %s31 = scalar_select %p28, %s29, %s30
      %p34 = pneg %p28
      %p35 = scmp.eq.s32.totalorder %s19, 1
      %p36 = por %p34, %p35
      %p37 = scmp.ne.s32.totalorder %s29, %s32
      %p38 = scmp.eq.s32.totalorder %s19, 0
      %p39 = por %p37, %p38
      %p40 = scmp.ne.s32.totalorder %s29, %s32
      %p41 = scmp.eq.s32.totalorder %s24, 1
      %p42 = por %p40, %p41
      %p43 = scmp.ne.s32.totalorder %s32, %s33
      %p44 = scmp.eq.s32.totalorder %s24, 0
      %p45 = por %p43, %p44
      %p46 = scmp.ne.s32.totalorder %s32, %s33
      %p47 = scmp.eq.s32.totalorder %s25, 1
      %p48 = por %p46, %p47
      %p50 = scmp.ne.s32.totalorder %s33, %s49
      %p51 = scmp.eq.s32.totalorder %s25, 0
      %p52 = por %p50, %p51
      %s53 = ssub.s32 %s19, %s26
      %p54 = scmp.eq.s32.totalorder %s53, 0
      %s56 = sadd.s32 %s55, 1
      %s57 = scalar_select %p54, %s55, %s56
      %p60 = pneg %p54
      %p61 = scmp.eq.s32.totalorder %s19, 1
      %p62 = por %p60, %p61
      %p63 = scmp.ne.s32.totalorder %s55, %s58
      %p64 = scmp.eq.s32.totalorder %s19, 0
      %p65 = por %p63, %p64
      %p66 = scmp.ne.s32.totalorder %s55, %s58
      %p67 = scmp.eq.s32.totalorder %s24, 1
      %p68 = por %p66, %p67
      %p69 = scmp.ne.s32.totalorder %s58, %s59
      %p70 = scmp.eq.s32.totalorder %s24, 0
      %p71 = por %p69, %p70
      %p72 = scmp.ne.s32.totalorder %s58, %s59
      %p73 = scmp.eq.s32.totalorder %s25, 1
      %p74 = por %p72, %p73
      %p76 = scmp.ne.s32.totalorder %s59, %s75
      %p77 = scmp.eq.s32.totalorder %s25, 0
      %p78 = por %p76, %p77
      %s80 = sadd.s32 %s79, 1
      %p83 = scmp.eq.s32.totalorder %s19, 1
      %p84 = scmp.ne.s32.totalorder %s79, %s81
      %p85 = scmp.eq.s32.totalorder %s19, 0
      %p86 = por %p84, %p85
      %p87 = scmp.ne.s32.totalorder %s79, %s81
      %p88 = scmp.eq.s32.totalorder %s24, 1
      %p89 = por %p87, %p88
      %p90 = scmp.ne.s32.totalorder %s81, %s82
      %p91 = scmp.eq.s32.totalorder %s24, 0
      %p92 = por %p90, %p91
      %p93 = scmp.ne.s32.totalorder %s81, %s82
      %p94 = scmp.eq.s32.totalorder %s25, 1
      %p95 = por %p93, %p94
      %p97 = scmp.ne.s32.totalorder %s82, %s96
      %p98 = scmp.eq.s32.totalorder %s25, 0
      %p99 = por %p97, %p98
      %s101 = sadd.s32 %s100, 1
      %p104 = scmp.eq.s32.totalorder %s19, 1
      %p105 = scmp.ne.s32.totalorder %s100, %s102
      %p106 = scmp.eq.s32.totalorder %s19, 0
      %p107 = por %p105, %p106
      %p108 = scmp.ne.s32.totalorder %s100, %s102
      %p109 = scmp.eq.s32.totalorder %s24, 1
      %p110 = por %p108, %p109
      %p111 = scmp.ne.s32.totalorder %s102, %s103
      %p112 = scmp.eq.s32.totalorder %s24, 0
      %p113 = por %p111, %p112
      %p114 = scmp.ne.s32.totalorder %s102, %s103
      %p115 = scmp.eq.s32.totalorder %s25, 1
      %p116 = por %p114, %p115
      %p118 = scmp.ne.s32.totalorder %s103, %s117
      %p119 = scmp.eq.s32.totalorder %s25, 0
      %p120 = por %p118, %p119
      %s121 = ssub.s32 %s19, %s26
      %p122 = scmp.eq.s32.totalorder %s121, 0
      %s124 = sadd.s32 %s123, 1
      %s125 = scalar_select %p122, %s123, %s124
      %p128 = pneg %p122
      %p129 = scmp.eq.s32.totalorder %s19, 1
      %p130 = por %p128, %p129
      %p131 = scmp.ne.s32.totalorder %s123, %s126
      %p132 = scmp.eq.s32.totalorder %s19, 0
      %p133 = por %p131, %p132
      %p134 = scmp.ne.s32.totalorder %s123, %s126
      %p135 = scmp.eq.s32.totalorder %s24, 1
      %p136 = por %p134, %p135
      %p137 = scmp.ne.s32.totalorder %s126, %s127
      %p138 = scmp.eq.s32.totalorder %s24, 0
      %p139 = por %p137, %p138
      %p140 = scmp.ne.s32.totalorder %s126, %s127
      %p141 = scmp.eq.s32.totalorder %s25, 1
      %p142 = por %p140, %p141
      %p144 = scmp.ne.s32.totalorder %s127, %s143
      %p145 = scmp.eq.s32.totalorder %s25, 0
      %p146 = por %p144, %p145
      %p147 = scmp.le.s32.totalorder 1, %s19
      %p148 = scmp.lt.s32.totalorder %s19, 3
      %p149 = pnand %p147, %p148
      %p150 = pneg %p149
      // Predicated region
      $region9: #{tpu_custom_call.1} parent=5 // pred_check
        _
      $region10: #{tpu_custom_call.1} parent=5 // pred_check_branch
        %152 = sbr.rel (%p149) target = $region12
      $region11: #{tpu_custom_call.1} parent=5 // pred_region
        %s153 = ssub.s32 %s19, 1
        // Predicated region
        $region13: #{tpu_custom_call.1} parent=11 // pred_check
          %p154 = pneg %p92
        $region14: #{tpu_custom_call.1} parent=11 // pred_check_branch
          %156 = sbr.rel (%p154) target = $region16
        $region15: #{tpu_custom_call.1} parent=11 // pred_region
          _
        $region16: #{tpu_custom_call.1} parent=11 // pred_fallthru
          _
        // Predicated region
        $region17: #{tpu_custom_call.1} parent=11 // pred_check
          %p157 = pneg %p113
        $region18: #{tpu_custom_call.1} parent=11 // pred_check_branch
          %159 = sbr.rel (%p157) target = $region20
        $region19: #{tpu_custom_call.1} parent=11 // pred_region
          _
        $region20: #{tpu_custom_call.1} parent=11 // pred_fallthru
          _
      $region12: #{tpu_custom_call.1} parent=5 // pred_fallthru
        _
      %p160 = scmp.lt.s32.totalorder %s19, 2
      // Predicated region
      $region21: #{tpu_custom_call.1} parent=5 // pred_check
        %p161 = pneg %p160
      $region22: #{tpu_custom_call.1} parent=5 // pred_check_branch
        %163 = sbr.rel (%p161) target = $region24
      $region23: #{tpu_custom_call.1} parent=5 // pred_region
        // Predicated region
        $region25: #{tpu_custom_call.1} parent=23 // pred_check
          %p164 = pneg %p39
        $region26: #{tpu_custom_call.1} parent=23 // pred_check_branch
          %166 = sbr.rel (%p164) target = $region28
        $region27: #{tpu_custom_call.1} parent=23 // pred_region
          %s167 = sand.u32 %s29, 1
          %s168 = scalar_lea.sflag [#allocation3], %s167
          %s169 = sand.u32 %s29, 1
          %s170 = smul.addr %s169, 128
          %s171 = scalar_lea.vmem [#allocation2], %s170
          %s173 = ssub.s32 2048, 2048
          %174 = vsyncadd %s168, %s173
          %s175 = smul.addr %s19, 16
          %s176 = smul.addr %s175, 128
          %s177 = scalar_lea.hbm %s0, %s176
          %s178 = sshll.u32 %s171, 4
          %s179 = int_to_ptr.vmem [resolvable:$true] %s178
          %184 = dma.hbm_to_vmem [thread:$0]  %s177, 2048, %s179, %s168, 128, 128, 8
        $region28: #{tpu_custom_call.1} parent=23 // pred_fallthru
          _
        // Predicated region
        $region29: #{tpu_custom_call.1} parent=23 // pred_check
          %p185 = pneg %p65
        $region30: #{tpu_custom_call.1} parent=23 // pred_check_branch
          %187 = sbr.rel (%p185) target = $region32
        $region31: #{tpu_custom_call.1} parent=23 // pred_region
          %s188 = sand.u32 %s55, 1
          %s189 = scalar_lea.sflag [#allocation6], %s188
          %s190 = sand.u32 %s55, 1
          %s191 = smul.addr %s190, 128
          %s192 = scalar_lea.vmem [#allocation5], %s191
          %s194 = ssub.s32 2048, 2048
          %195 = vsyncadd %s189, %s194
          %s196 = smul.addr %s19, 16
          %s197 = smul.addr %s196, 128
          %s198 = scalar_lea.hbm %s1, %s197
          %s199 = sshll.u32 %s192, 4
          %s200 = int_to_ptr.vmem [resolvable:$true] %s199
          %205 = dma.hbm_to_vmem [thread:$0]  %s198, 2048, %s200, %s189, 128, 128, 8
        $region32: #{tpu_custom_call.1} parent=23 // pred_fallthru
          _
      $region24: #{tpu_custom_call.1} parent=5 // pred_fallthru
        _
      %p206 = scmp.le.s32.totalorder 1, %s19
      %p207 = scmp.lt.s32.totalorder %s19, 3
      %p208 = pnand %p206, %p207
      %p209 = pneg %p208
      // Predicated region
      $region33: #{tpu_custom_call.1} parent=5 // pred_check
        _
      $region34: #{tpu_custom_call.1} parent=5 // pred_check_branch
        %211 = sbr.rel (%p208) target = $region36
      $region35: #{tpu_custom_call.1} parent=5 // pred_region
        %s212 = ssub.s32 %s19, 1
        %s213 = sand.u32 %s32, 1
        %s214 = scalar_lea.sflag [#allocation3], %s213
        %s215 = sand.u32 %s32, 1
        %s216 = smul.addr %s215, 128
        %s217 = scalar_lea.vmem [#allocation2], %s216
        // Predicated region
        $region37: #{tpu_custom_call.1} parent=35 // pred_check
          %p218 = pneg %p45
        $region38: #{tpu_custom_call.1} parent=35 // pred_check_branch
          %220 = sbr.rel (%p218) target = $region40
        $region39: #{tpu_custom_call.1} parent=35 // pred_region
          %221 = dma.done %s214, 2048
        $region40: #{tpu_custom_call.1} parent=35 // pred_fallthru
          _
        %s222 = sand.u32 %s58, 1
        %s223 = scalar_lea.sflag [#allocation6], %s222
        %s224 = sand.u32 %s58, 1
        %s225 = smul.addr %s224, 128
        %s226 = scalar_lea.vmem [#allocation5], %s225
        // Predicated region
        $region41: #{tpu_custom_call.1} parent=35 // pred_check
          %p227 = pneg %p71
        $region42: #{tpu_custom_call.1} parent=35 // pred_check_branch
          %229 = sbr.rel (%p227) target = $region44
        $region43: #{tpu_custom_call.1} parent=35 // pred_region
          %230 = dma.done %s223, 2048
        $region44: #{tpu_custom_call.1} parent=35 // pred_fallthru
          _
        %s231 = sand.u32 %s32, 1
        %s232 = scalar_lea.sflag [#allocation3], %s231
        %s233 = sand.u32 %s32, 1
        %s234 = smul.addr %s233, 128
        %s235 = scalar_lea.vmem [#allocation2], %s234
        %p236 = pneg %p45
        %p237 = pneg %p42
        %s238 = sand.u32 %s58, 1
        %s239 = scalar_lea.sflag [#allocation6], %s238
        %s240 = sand.u32 %s58, 1
        %s241 = smul.addr %s240, 128
        %s242 = scalar_lea.vmem [#allocation5], %s241
        %p243 = pneg %p71
        %p244 = pneg %p68
        %p245 = pneg %p92
        %p246 = pneg %p89
        %p247 = pneg %p113
        %p248 = pneg %p110
        %p249 = pneg %p139
        %p250 = pneg %p136
        %s251 = sand.u32 %s126, 1
        %s252 = scalar_lea.sflag [#allocation4], %s251
        %s253 = sand.u32 %s126, 1
        %s254 = smul.addr %s253, 8
        %s255 = scalar_lea.vmem [#allocation7], %s254
        %v256 = vld [vmem:[%s2] sm:$0xff]
        %v257 = vld [vmem:[%s3] sm:$0xff]
        %v258 = vld [vmem:[%s3 + $0x8] sm:$0xff]
        %v259 = vld [vmem:[%s3 + $0x10] sm:$0xff]
        %v260 = vld [vmem:[%s3 + $0x18] sm:$0xff]
        %v261 = vld [vmem:[%s217] sm:$0xff]
        %v262 = vld [vmem:[%s217 + $0x8] sm:$0xff]
        %v263 = vld [vmem:[%s217 + $0x10] sm:$0xff]
        %v264 = vld [vmem:[%s217 + $0x18] sm:$0xff]
        %v265 = vld [vmem:[%s217 + $0x20] sm:$0xff]
        %v266 = vld [vmem:[%s217 + $0x28] sm:$0xff]
        %v267 = vld [vmem:[%s217 + $0x30] sm:$0xff]
        %v268 = vld [vmem:[%s217 + $0x38] sm:$0xff]
        %v269 = vld [vmem:[%s217 + $0x40] sm:$0xff]
        %v270 = vld [vmem:[%s217 + $0x48] sm:$0xff]
        %v271 = vld [vmem:[%s217 + $0x50] sm:$0xff]
        %v272 = vld [vmem:[%s217 + $0x58] sm:$0xff]
        %v273 = vld [vmem:[%s217 + $0x60] sm:$0xff]
        %v274 = vld [vmem:[%s217 + $0x68] sm:$0xff]
        %v275 = vld [vmem:[%s217 + $0x70] sm:$0xff]
        %v276 = vld [vmem:[%s217 + $0x78] sm:$0xff]
        %v277 = vld [vmem:[%s226] sm:$0xff]
        %v278 = vld [vmem:[%s226 + $0x8] sm:$0xff]
        %v279 = vld [vmem:[%s226 + $0x10] sm:$0xff]
        %v280 = vld [vmem:[%s226 + $0x18] sm:$0xff]
        %v281 = vld [vmem:[%s226 + $0x20] sm:$0xff]
        %v282 = vld [vmem:[%s226 + $0x28] sm:$0xff]
        %v283 = vld [vmem:[%s226 + $0x30] sm:$0xff]
        %v284 = vld [vmem:[%s226 + $0x38] sm:$0xff]
        %v285 = vld [vmem:[%s226 + $0x40] sm:$0xff]
        %v286 = vld [vmem:[%s226 + $0x48] sm:$0xff]
        %v287 = vld [vmem:[%s226 + $0x50] sm:$0xff]
        %v288 = vld [vmem:[%s226 + $0x58] sm:$0xff]
        %v289 = vld [vmem:[%s226 + $0x60] sm:$0xff]
        %v290 = vld [vmem:[%s226 + $0x68] sm:$0xff]
        %v291 = vld [vmem:[%s226 + $0x70] sm:$0xff]
        %v292 = vld [vmem:[%s226 + $0x78] sm:$0xff]
        %v293 = vsub.f32 %v261, %v277
        %v294 = vsub.f32 %v262, %v278
        %v295 = vsub.f32 %v263, %v279
        %v296 = vsub.f32 %v264, %v280
        %v297 = vsub.f32 %v265, %v281
        %v298 = vsub.f32 %v266, %v282
        %v299 = vsub.f32 %v267, %v283
        %v300 = vsub.f32 %v268, %v284
        %v301 = vsub.f32 %v269, %v285
        %v302 = vsub.f32 %v270, %v286
        %v303 = vsub.f32 %v271, %v287
        %v304 = vsub.f32 %v272, %v288
        %v305 = vsub.f32 %v273, %v289
        %v306 = vsub.f32 %v274, %v290
        %v307 = vsub.f32 %v275, %v291
        %v308 = vsub.f32 %v276, %v292
        %vm309 = vcmask 261120
        %v310 = vsel %vm309, %v293, 0.0
        %v311 = vsel %vm309, %v297, 0.0
        %v312 = vadd.f32 %v310, %v311
        %v313 = vsel %vm309, %v301, 0.0
        %v314 = vadd.f32 %v312, %v313
        %v315 = vsel %vm309, %v305, 0.0
        %v316 = vadd.f32 %v314, %v315
        %v317 = vsel %vm309, %v294, 0.0
        %v318 = vsel %vm309, %v298, 0.0
        %v319 = vadd.f32 %v317, %v318
        %v320 = vsel %vm309, %v302, 0.0
        %v321 = vadd.f32 %v319, %v320
        %v322 = vsel %vm309, %v306, 0.0
        %v323 = vadd.f32 %v321, %v322
        %v324 = vsel %vm309, %v295, 0.0
        %v325 = vsel %vm309, %v299, 0.0
        %v326 = vadd.f32 %v324, %v325
        %v327 = vsel %vm309, %v303, 0.0
        %v328 = vadd.f32 %v326, %v327
        %v329 = vsel %vm309, %v307, 0.0
        %v330 = vadd.f32 %v328, %v329
        %v331 = vsel %vm309, %v296, 0.0
        %v332 = vsel %vm309, %v300, 0.0
        %v333 = vadd.f32 %v331, %v332
        %v334 = vsel %vm309, %v304, 0.0
        %v335 = vadd.f32 %v333, %v334
        %v336 = vsel %vm309, %v308, 0.0
        %v337 = vadd.f32 %v335, %v336
        %v338 = vlaneseq
        %v339 = vshrl.u32 %v338, 7
        %v340 = vlaneseq
        %v341 = vand.u32 %v340, 127
        %v343 = vsel %vm309, %v256, 0
        %345 = vmatprep.subr.mxu0 0.0
        %346 = vmatpush1.msra.mxu0 0.0
        %347 = vmatprep.subr.mxu0 0.0
        %348 = vmatpush1.msra.mxu0 0.0
        %349 = vmatprep.subr.mxu0 0.0
        %350 = vmatpush1.msra.mxu0 0.0
        %351 = vmatprep.subr.mxu0 0.0
        %352 = vmatpush1.msra.mxu0 0.0
        %353 = vmatprep.subr.mxu0 0.0
        %354 = vmatpush1.msra.mxu0 0.0
        %355 = vmatprep.subr.mxu0 0.0
        %356 = vmatpush1.msra.mxu0 0.0
        %357 = vmatprep.subr.mxu0 0.0
        %358 = vmatpush1.msra.mxu0 0.0
        %359 = vmatprep.subr.mxu0 0.0
        %360 = vmatpush1.msra.mxu0 0.0
        %361 = vmatprep.subr.mxu0 0.0
        %362 = vmatpush1.msra.mxu0 0.0
        %363 = vmatprep.subr.mxu0 0.0
        %364 = vmatpush1.msra.mxu0 0.0
        %365 = vmatprep.subr.mxu0 0.0
        %366 = vmatpush1.msra.mxu0 0.0
        %367 = vmatprep.subr.mxu0 0.0
        %368 = vmatpush1.msra.mxu0 0.0
        %369 = vmatprep.subr.mxu0 0.0
        %370 = vmatpush1.msra.mxu0 %v337
        %371 = vmatprep.subr.mxu0 0.0
        %372 = vmatpush1.msra.mxu0 %v330
        %373 = vmatprep.subr.mxu0 0.0
        %374 = vmatpush1.msra.mxu0 %v323
        %375 = vmatprep.subr.mxu0 0.0
        %376 = vmatpush1.msra.mxu0 %v316
        %377 = vmatprep.subr.mxu0 0.0
        %378 = vmatpush2.msra.mxu0 0.0
        %379 = vmatprep.subr.mxu0 0.0
        %380 = vmatpush2.msra.mxu0 0.0
        %381 = vmatprep.subr.mxu0 0.0
        %382 = vmatpush2.msra.mxu0 0.0
        %383 = vmatprep.subr.mxu0 0.0
        %384 = vmatpush2.msra.mxu0 0.0
        %385 = vmatprep.subr.mxu0 0.0
        %386 = vmatpush2.msra.mxu0 0.0
        %387 = vmatprep.subr.mxu0 0.0
        %388 = vmatpush2.msra.mxu0 0.0
        %389 = vmatprep.subr.mxu0 0.0
        %390 = vmatpush2.msra.mxu0 0.0
        %391 = vmatprep.subr.mxu0 0.0
        %392 = vmatpush2.msra.mxu0 0.0
        %393 = vmatprep.subr.mxu0 0.0
        %394 = vmatpush2.msra.mxu0 0.0
        %395 = vmatprep.subr.mxu0 0.0
        %396 = vmatpush2.msra.mxu0 0.0
        %397 = vmatprep.subr.mxu0 0.0
        %398 = vmatpush2.msra.mxu0 0.0
        %399 = vmatprep.subr.mxu0 0.0
        %400 = vmatpush2.msra.mxu0 0.0
        %401 = vmatprep.subr.mxu0 0.0
        %402 = vmatpush2.msra.mxu0 0.0
        %403 = vmatprep.subr.mxu0 0.0
        %404 = vmatpush2.msra.mxu0 0.0
        %405 = vmatprep.subr.mxu0 0.0
        %406 = vmatpush2.msra.mxu0 0.0
        %407 = vmatprep.subr.mxu0 0.0
        %408 = vmatpush2.msra.mxu0 0.0
        %409 = vmatprep.mubr.f32.mxu0 0.0
        %410 = vmatmul.mubr.f32.gmra.mxu0 %v343
        %v411 = vpop.f32.mrf.mxu0
        %v412 = vadd.f32 0.0, %v411
        %v413 = vpop.f32.mrf.mxu0
        %414 = vdwg.mxu0
        %v416 = vsel %vm309, %v412, 0
        %418 = vmatprep.subr.mxu0 0.0
        %419 = vmatpush1.msra.mxu0 0.0
        %420 = vmatprep.subr.mxu0 0.0
        %421 = vmatpush1.msra.mxu0 0.0
        %422 = vmatprep.subr.mxu0 0.0
        %423 = vmatpush1.msra.mxu0 0.0
        %424 = vmatprep.subr.mxu0 0.0
        %425 = vmatpush1.msra.mxu0 0.0
        %426 = vmatprep.subr.mxu0 0.0
        %427 = vmatpush1.msra.mxu0 0.0
        %428 = vmatprep.subr.mxu0 0.0
        %429 = vmatpush1.msra.mxu0 0.0
        %430 = vmatprep.subr.mxu0 0.0
        %431 = vmatpush1.msra.mxu0 0.0
        %432 = vmatprep.subr.mxu0 0.0
        %433 = vmatpush1.msra.mxu0 0.0
        %434 = vmatprep.subr.mxu0 0.0
        %435 = vmatpush1.msra.mxu0 0.0
        %436 = vmatprep.subr.mxu0 0.0
        %437 = vmatpush1.msra.mxu0 0.0
        %438 = vmatprep.subr.mxu0 0.0
        %439 = vmatpush1.msra.mxu0 0.0
        %440 = vmatprep.subr.mxu0 0.0
        %441 = vmatpush1.msra.mxu0 0.0
        %442 = vmatprep.subr.mxu0 0.0
        %443 = vmatpush1.msra.mxu0 %v260
        %444 = vmatprep.subr.mxu0 0.0
        %445 = vmatpush1.msra.mxu0 %v259
        %446 = vmatprep.subr.mxu0 0.0
        %447 = vmatpush1.msra.mxu0 %v258
        %448 = vmatprep.subr.mxu0 0.0
        %449 = vmatpush1.msra.mxu0 %v257
        %450 = vmatprep.subr.mxu0 0.0
        %451 = vmatpush2.msra.mxu0 0.0
        %452 = vmatprep.subr.mxu0 0.0
        %453 = vmatpush2.msra.mxu0 0.0
        %454 = vmatprep.subr.mxu0 0.0
        %455 = vmatpush2.msra.mxu0 0.0
        %456 = vmatprep.subr.mxu0 0.0
        %457 = vmatpush2.msra.mxu0 0.0
        %458 = vmatprep.subr.mxu0 0.0
        %459 = vmatpush2.msra.mxu0 0.0
        %460 = vmatprep.subr.mxu0 0.0
        %461 = vmatpush2.msra.mxu0 0.0
        %462 = vmatprep.subr.mxu0 0.0
        %463 = vmatpush2.msra.mxu0 0.0
        %464 = vmatprep.subr.mxu0 0.0
        %465 = vmatpush2.msra.mxu0 0.0
        %466 = vmatprep.subr.mxu0 0.0
        %467 = vmatpush2.msra.mxu0 0.0
        %468 = vmatprep.subr.mxu0 0.0
        %469 = vmatpush2.msra.mxu0 0.0
        %470 = vmatprep.subr.mxu0 0.0
        %471 = vmatpush2.msra.mxu0 0.0
        %472 = vmatprep.subr.mxu0 0.0
        %473 = vmatpush2.msra.mxu0 0.0
        %474 = vmatprep.subr.mxu0 0.0
        %475 = vmatpush2.msra.mxu0 0.0
        %476 = vmatprep.subr.mxu0 0.0
        %477 = vmatpush2.msra.mxu0 0.0
        %478 = vmatprep.subr.mxu0 0.0
        %479 = vmatpush2.msra.mxu0 0.0
        %480 = vmatprep.subr.mxu0 0.0
        %481 = vmatpush2.msra.mxu0 0.0
        %482 = vmatprep.mubr.f32.mxu0 0.0
        %483 = vmatmul.mubr.f32.gmra.mxu0 %v416
        %v484 = vpop.f32.mrf.mxu0
        %v485 = vadd.f32 0.0, %v484
        %v486 = vpop.f32.mrf.mxu0
        %487 = vdwg.mxu0
        %vm488 = vcmp.eq.s32.totalorder %v341, 0
        %vm489 = vcmask 1047616
        %490 = vrot.lane.b32.xlu0 %v485, 8
        %v491 = vpop.permute.xlu0 %490
        %v492 = vsel %vm489, %v491, %v485
        %493 = vrot.lane.b32.xlu0 %v492, 8
        %v494 = vpop.permute.xlu0 %493
        %v495 = vsel %vm489, %v494, %v485
        %497 = vrot.lane.b32.xlu0 %v495, 121
        %v498 = vpop.permute.xlu0 %497
        %v500 = vsel %vm488, 0.0, %v498
        %vm501 = vcmp.eq.s32.totalorder %v341, 7
        %502 = vrot.lane.b32.xlu0 %v495, 127
        %v503 = vpop.permute.xlu0 %502
        %v505 = vsel %vm501, 0.0, %v503
        %vm506 = vcmp.eq.s32.totalorder %v339, 0
        %v507 = vrot.slane %v485, 7
        %v508 = vsel %vm506, 0.0, %v507
        %vm509 = vcmp.eq.s32.totalorder %v339, 7
        %v510 = vrot.slane %v485, 1
        %v511 = vsel %vm509, 0.0, %v510
        %v512 = vsub.f32 %v485, %v500
        %v513 = vmul.f32 %v512, %v512
        %v514 = vsub.f32 %v485, %v505
        %v515 = vmul.f32 %v514, %v514
        %v516 = vadd.f32 %v513, %v515
        %v517 = vsub.f32 %v485, %v508
        %v518 = vmul.f32 %v517, %v517
        %v519 = vadd.f32 %v516, %v518
        %v520 = vsub.f32 %v485, %v511
        %v521 = vmul.f32 %v520, %v520
        %v522 = vadd.f32 %v519, %v521
        %vm523 = vcmask 64512
        %524 = vst.msk [vmem:[%s255] sm:$0xff] %vm523, %v522
        %s525 = sand.u32 %s126, 1
        %s526 = scalar_lea.sflag [#allocation4], %s525
        %s527 = sand.u32 %s126, 1
        %s528 = smul.addr %s527, 8
        %s529 = scalar_lea.vmem [#allocation7], %s528
        // Predicated region
        $region45: #{tpu_custom_call.1} parent=35 // pred_check
          %p530 = pneg %p136
        $region46: #{tpu_custom_call.1} parent=35 // pred_check_branch
          %532 = sbr.rel (%p530) target = $region48
        $region47: #{tpu_custom_call.1} parent=35 // pred_region
          %s534 = ssub.s32 128, 128
          %535 = vsyncadd %s526, %s534
          %s536 = smul.addr %s24, 128
          %s537 = scalar_lea.hbm %s4, %s536
          %s539 = sshll.u32 %s529, 4
          %s540 = int_to_ptr.vmem [resolvable:$true] %s539
          %542 = dma.vmem_to_hbm [thread:$0]  %s540, 128, %s537, %s526
        $region48: #{tpu_custom_call.1} parent=35 // pred_fallthru
          _
      $region36: #{tpu_custom_call.1} parent=5 // pred_fallthru
        _
      %p543 = scmp.le.s32.totalorder 2, %s19
      // Predicated region
      $region49: #{tpu_custom_call.1} parent=5 // pred_check
        %p544 = pneg %p543
      $region50: #{tpu_custom_call.1} parent=5 // pred_check_branch
        %546 = sbr.rel (%p544) target = $region52
      $region51: #{tpu_custom_call.1} parent=5 // pred_region
        %s547 = ssub.s32 %s19, 2
        // Predicated region
        $region53: #{tpu_custom_call.1} parent=51 // pred_check
          %p548 = pneg %p142
        $region54: #{tpu_custom_call.1} parent=51 // pred_check_branch
          %550 = sbr.rel (%p548) target = $region56
        $region55: #{tpu_custom_call.1} parent=51 // pred_region
          %s551 = sand.u32 %s127, 1
          %s552 = scalar_lea.sflag [#allocation4], %s551
          %s553 = sand.u32 %s127, 1
          %s554 = smul.addr %s553, 8
          %s555 = scalar_lea.vmem [#allocation7], %s554
          %556 = dma.done %s552, 128
        $region56: #{tpu_custom_call.1} parent=51 // pred_fallthru
          _
      $region52: #{tpu_custom_call.1} parent=5 // pred_fallthru
        _
    $region6: #{tpu_custom_call.1} parent=1 // loop_footer
      %s23 = sadd.s32 1, %s19
    $region7: #{tpu_custom_call.1} parent=1 // loop_footer_branch
      %18 = sbr.rel target = $region3
    $region8: #{tpu_custom_call.1} parent=1 // loop_exit
      _
    %557 = vsyncpa [#allocation3], 1
    %s558 = scalar_lea.sflag [#allocation3], 1
    %559 = vsyncpa %s558, 1
    %560 = vsyncpa [#allocation6], 1
    %s561 = scalar_lea.sflag [#allocation6], 1
    %562 = vsyncpa %s561, 1
    %563 = vsyncpa [#allocation4], 1
    %s564 = scalar_lea.sflag [#allocation4], 1
    %565 = vsyncpa %s564, 1

</llo_original>
